<compile_context>
chip_gen: v7x
topology: tpu7x:2x2x1
jax: 0.10.0
libtpu: 0.0.40
codegen_flags: <defaults>
</compile_context>

<pallas_src>
import functools

import jax
import jax.numpy as jnp
from jax.experimental import pallas as pl
from jax.experimental.pallas import tpu as pltpu


def _round_up(x: int, m: int) -> int:
    return ((x + m - 1) // m) * m


def _cdiv(a: int, b: int) -> int:
    return (a + b - 1) // b


def _pick_divisor_tile(padded_dim: int, cap: int, align: int) -> int:
    """Largest multiple of `align` that divides `padded_dim` and is <= cap."""
    cap = max(cap, align)
    n_units = padded_dim // align
    best = align
    for k in range(1, n_units + 1):
        t = k * align
        if t > cap:
            break
        if n_units % k == 0:
            best = t
    return best


# ---------------------------------------------------------------------------
# One-time parameter preprocessing (runs ONCE at model-setup time, never in
# the per-call path).
# ---------------------------------------------------------------------------
def prepare_pcalin_params(weight, bias, *, param_dtype=None):
    """Transpose PyTorch [OUT, IN] weight to [IN, OUT] and zero-pad both dims
    to multiples of 128 (lane alignment).  Optionally store bf16 weights to
    halve weight HBM traffic."""
    OUT, IN = weight.shape
    INp, OUTp = _round_up(IN, 128), _round_up(OUT, 128)
    w_io = jnp.asarray(weight).T                                  # [IN, OUT]
    if (INp, OUTp) != (IN, OUT):
        w_io = jnp.pad(w_io, ((0, INp - IN), (0, OUTp - OUT)))
    if param_dtype is not None:
        w_io = w_io.astype(param_dtype)
    b_row = jnp.asarray(bias, jnp.float32).reshape(1, OUT)
    if OUTp != OUT:
        b_row = jnp.pad(b_row, ((0, 0), (0, OUTp - OUT)))
    return w_io, b_row


# ---------------------------------------------------------------------------
# Kernel
# ---------------------------------------------------------------------------
def _linear_kernel(x_ref, w_ref, b_ref, o_ref, *, compute_dtype):
    # x_ref: [tm, tk]   w_ref: [tk, tn]   b_ref: [1, tn]
    # o_ref: [tm, tn] f32, resident across the K grid axis (same output block
    # index for every k), so we accumulate directly into it — no scratch.
    k = pl.program_id(2)
    xb = x_ref[...]
    wb = w_ref[...]
    if compute_dtype is not None:          # bf16 operands, f32 accumulation
        xb = xb.astype(compute_dtype)
        wb = wb.astype(compute_dtype)
    part = jnp.dot(xb, wb, preferred_element_type=jnp.float32)

    @pl.when(k == 0)
    def _():
        o_ref[...] = part + b_ref[...]

    @pl.when(k != 0)
    def _():
        o_ref[...] += part


# ---------------------------------------------------------------------------
# Forward
# ---------------------------------------------------------------------------
@functools.partial(
    jax.jit, static_argnames=("out_features", "tm", "tn", "tk", "compute_dtype"))
def pcalin_forward(x, w_io, b_row, *, out_features,
                   tm=512, tn=512, tk=1024, compute_dtype=None):
    """Pallas nn.Linear forward.

    x:     [B, IN] float32
    w_io:  [INp, OUTp] pre-transposed/pre-padded weight (prepare_pcalin_params)
    b_row: [1, OUTp] float32 pre-padded bias
    """
    B, IN = x.shape
    INp, OUTp = w_io.shape
    assert IN <= INp and out_features <= OUTp

    # ---- static tile selection ----------------------------------------------
    Bq = _round_up(B, 8)
    tm = max(8, min(tm, 1024))
    n_m = _cdiv(Bq, tm)
    tm = _round_up(_cdiv(Bq, n_m), 8)        # near-equal 8-aligned M chunks
    Bp = n_m * tm                            # padding < one tile

    # K / N tiles must divide the pre-padded weight dims.
    tk = _pick_divisor_tile(INp, min(tk, 2048), 128)

    tn_cap = tn
    if n_m == 1 and OUTp >= 256:
        # v7x has 2 TensorCores sharded over "parallel" axes: with a single M
        # block, keep >= 2 blocks on the N axis so both cores get work.
        tn_cap = min(tn_cap, (OUTp // 2 // 128) * 128)
    tn = _pick_divisor_tile(OUTp, tn_cap, 128)

    # Keep the double-buffered footprint well under VMEM (v7x: 64 MiB phys,
    # 32 MiB scoped limit requested below).
    x_item = x.dtype.itemsize
    w_item = w_io.dtype.itemsize

    def _footprint(_tm, _tn, _tk):
        return (2 * _tm * _tk * x_item + 2 * _tk * _tn * w_item   # in tiles x2
                + 2 * (_tm * _tn + _tn) * 4)                      # f32 out + bias

    budget = 28 * 1024 * 1024
    for _ in range(16):
        if _footprint(tm, tn, tk) <= budget:
            break
        if tk > 128:
            tk = _pick_divisor_tile(INp, tk // 2, 128)
        elif tn > 128:
            tn = _pick_divisor_tile(OUTp, tn // 2, 128)
        elif tm > 8:
            n_m *= 2
            tm = _round_up(_cdiv(Bq, n_m), 8)
            Bp = n_m * tm
        else:
            break

    # ---- per-call padding: only x (rows + K); never the weight --------------
    if (Bp, INp) != (B, IN):
        x = jnp.pad(x, ((0, Bp - B), (0, INp - IN)))

    n_m_blocks, n_n, n_k = Bp // tm, OUTp // tn, INp // tk
    grid = (n_m_blocks, n_n, n_k)

    out = pl.pallas_call(
        functools.partial(_linear_kernel, compute_dtype=compute_dtype),
        out_shape=jax.ShapeDtypeStruct((Bp, OUTp), jnp.float32),
        grid=grid,
        in_specs=[
            pl.BlockSpec((tm, tk), lambda i, j, k: (i, k)),   # x tile
            pl.BlockSpec((tk, tn), lambda i, j, k: (k, j)),   # W tile ([IN, OUT])
            pl.BlockSpec((1, tn), lambda i, j, k: (0, j)),    # bias tile
        ],
        out_specs=pl.BlockSpec((tm, tn), lambda i, j, k: (i, j)),
        compiler_params=pltpu.CompilerParams(
            dimension_semantics=("parallel", "parallel", "arbitrary"),
            vmem_limit_bytes=32 * 1024 * 1024,   # v5e scoped default is 16 MiB
        ),
        cost_estimate=pl.CostEstimate(
            flops=2 * Bp * INp * OUTp,
            transcendentals=0,
            bytes_accessed=(Bp * INp * x_item * n_n               # x read per N blk
                            + INp * OUTp * w_item * n_m_blocks    # W read per M blk
                            + OUTp * 4 * n_m_blocks               # bias
                            + Bp * OUTp * 4),                     # out written once
        ),
    )(x, w_io, b_row)

    if (Bp, OUTp) != (B, out_features):
        out = out[:B, :out_features]
    return out


if __name__ == "__main__":
    key = jax.random.PRNGKey(0)

    # --- Case 1: the module's toy config: Linear(32, 16), batch 8 ------------
    IN_F, OUT_F, BATCH = 32, 16, 8
    kx, kw, kb, key = jax.random.split(key, 4)
    bound = 1.0 / (IN_F ** 0.5)
    weight = jax.random.uniform(kw, (OUT_F, IN_F), jnp.float32,
                                minval=-bound, maxval=bound)   # PyTorch [OUT, IN]
    bias = jax.random.uniform(kb, (OUT_F,), jnp.float32,
                              minval=-bound, maxval=bound)
    x = jax.random.normal(kx, (BATCH, IN_F), jnp.float32)

    w_io, b_row = prepare_pcalin_params(weight, bias)          # once, offline
    y = jax.block_until_ready(pcalin_forward(x, w_io, b_row, out_features=OUT_F))
    y_ref = x @ weight.T + bias
    assert y.shape == (BATCH, OUT_F)
    assert jnp.allclose(y, y_ref, atol=1e-5, rtol=1e-5)

    # --- Case 2: tiled f32 path (multi-block M/N/K grid, awkward batch) ------
    B2, IN2, OUT2 = 300, 768, 512
    kx2, kw2, kb2, key = jax.random.split(key, 4)
    w2 = jax.random.normal(kw2, (OUT2, IN2), jnp.float32) * 0.05
    b2 = jax.random.normal(kb2, (OUT2,), jnp.float32) * 0.05
    x2 = jax.random.normal(kx2, (B2, IN2), jnp.float32)

    w2_io, b2_row = prepare_pcalin_params(w2, b2)
    y2 = jax.block_until_ready(
        pcalin_forward(x2, w2_io, b2_row, out_features=OUT2, tk=256))
    y2_ref = x2 @ w2.T + b2
    assert y2.shape == (B2, OUT2)
    assert jnp.allclose(y2, y2_ref, atol=2e-3, rtol=2e-3)

    # --- Case 3: bf16 weights + bf16 operands, f32 accumulation --------------
    w3_io, b3_row = prepare_pcalin_params(w2, b2, param_dtype=jnp.bfloat16)
    y3 = jax.block_until_ready(
        pcalin_forward(x2, w3_io, b3_row, out_features=OUT2,
                       compute_dtype=jnp.bfloat16))
    assert y3.shape == (B2, OUT2)
    assert jnp.allclose(y3, y2_ref, atol=5e-2, rtol=5e-2)

    print("KERNEL_OK")
</pallas_src>

<mosaic_0001>
module attributes {stable_mosaic.version = 11 : i64} {
  func.func @_linear_kernel(%arg0: i32, %arg1: i32, %arg2: i32, %arg3: memref<8x128xf32, #tpu.memory_space<vmem>>, %arg4: memref<128x128xf32, #tpu.memory_space<vmem>>, %arg5: memref<1x128xf32, #tpu.memory_space<vmem>>, %arg6: memref<8x128xf32, #tpu.memory_space<vmem>>) attributes {dimension_semantics = [#tpu.dimension_semantics<parallel>, #tpu.dimension_semantics<parallel>, #tpu.dimension_semantics<arbitrary>], iteration_bounds = array<i64: 1, 1, 1>, scalar_prefetch = 0 : i64, scratch_operands = 0 : i64, tpu.core_type = #tpu.core_type<tc>, window_params = [{transform_indices = @transform_0, window_bounds = array<i64: 8, 128>}, {transform_indices = @transform_1, window_bounds = array<i64: 128, 128>}, {transform_indices = @transform_2, window_bounds = array<i64: 1, 128>}, {transform_indices = @transform_3, window_bounds = array<i64: 8, 128>}]} {
    %c0 = arith.constant 0 : index
    %c0_0 = arith.constant 0 : index
    %0 = vector.load %arg3[%c0, %c0_0] : memref<8x128xf32, #tpu.memory_space<vmem>>, vector<8x128xf32>
    %c0_1 = arith.constant 0 : index
    %c0_2 = arith.constant 0 : index
    %1 = vector.load %arg4[%c0_1, %c0_2] : memref<128x128xf32, #tpu.memory_space<vmem>>, vector<128x128xf32>
    %cst = arith.constant dense<0.000000e+00> : vector<8x128xf32>
    %2 = tpu.matmul %0, %1, %cst {dimension_numbers = #tpu.dot_dimension_numbers<[1], [0], [0], [1], [0, 0, 1, 1], [], []>} : vector<8x128xf32>, vector<128x128xf32>, vector<8x128xf32> -> vector<8x128xf32>
    %c0_i32 = arith.constant 0 : i32
    %3 = arith.cmpi eq, %arg2, %c0_i32 : i32
    %4 = arith.extui %3 : i1 to i32
    %c0_i32_3 = arith.constant 0 : i32
    %5 = arith.cmpi ne, %4, %c0_i32_3 : i32
    scf.if %5 {
      %c0_6 = arith.constant 0 : index
      %c0_7 = arith.constant 0 : index
      %9 = vector.load %arg5[%c0_6, %c0_7] : memref<1x128xf32, #tpu.memory_space<vmem>>, vector<1x128xf32>
      %10 = vector.broadcast %9 : vector<1x128xf32> to vector<8x128xf32>
      %11 = arith.addf %2, %10 : vector<8x128xf32>
      %c0_8 = arith.constant 0 : index
      %c0_9 = arith.constant 0 : index
      %12 = vector.load %arg6[%c0_8, %c0_9] : memref<8x128xf32, #tpu.memory_space<vmem>>, vector<8x128xf32>
      tpu.vector_store %arg6[%c0_8, %c0_9], %11 {strides = array<i32>} : memref<8x128xf32, #tpu.memory_space<vmem>>, vector<8x128xf32>,
    } else {
    }
    %c0_i32_4 = arith.constant 0 : i32
    %6 = arith.cmpi ne, %arg2, %c0_i32_4 : i32
    %7 = arith.extui %6 : i1 to i32
    %c0_i32_5 = arith.constant 0 : i32
    %8 = arith.cmpi ne, %7, %c0_i32_5 : i32
    scf.if %8 {
      %c0_6 = arith.constant 0 : index
      %c0_7 = arith.constant 0 : index
      %9 = vector.load %arg6[%c0_6, %c0_7] : memref<8x128xf32, #tpu.memory_space<vmem>>, vector<8x128xf32>
      %10 = arith.addf %9, %2 : vector<8x128xf32>
      %c0_8 = arith.constant 0 : index
      %c0_9 = arith.constant 0 : index
      %11 = vector.load %arg6[%c0_8, %c0_9] : memref<8x128xf32, #tpu.memory_space<vmem>>, vector<8x128xf32>
      tpu.vector_store %arg6[%c0_8, %c0_9], %10 {strides = array<i32>} : memref<8x128xf32, #tpu.memory_space<vmem>>, vector<8x128xf32>,
    } else {
    }
    return
  }
  func.func @transform_0(%arg0: i32, %arg1: i32, %arg2: i32) -> (i32, i32) {
    %c0_i32 = arith.constant 0 : i32
    return %arg0, %arg2 : i32, i32
  }
  func.func @transform_1(%arg0: i32, %arg1: i32, %arg2: i32) -> (i32, i32) {
    %c0_i32 = arith.constant 0 : i32
    return %arg2, %arg1 : i32, i32
  }
  func.func @transform_2(%arg0: i32, %arg1: i32, %arg2: i32) -> (i32, i32) {
    %c0_i32 = arith.constant 0 : i32
    %c0_i32_0 = arith.constant 0 : i32
    return %c0_i32, %arg1 : i32, i32
  }
  func.func @transform_3(%arg0: i32, %arg1: i32, %arg2: i32) -> (i32, i32) {
    %c0_i32 = arith.constant 0 : i32
    return %arg0, %arg1 : i32, i32
  }
}

</mosaic_0001>

<llo_original>
// kernel: pcalin_forward.1
$region0: #{pcalin_forward.1}
  #allocation0 [shape = 'u32[]', space=smem, size = 0x4, offset = 0x4, fixed_abs, tag = 'smem constant byte address 0x4 - core index']
  #allocation1 [shape = 'u32[144,128]{1,0:T(1,128)}', space=vmem, size = 0x12000, scoped, tag = 'internal scratch']
  %s0 = inlined_call_operand.vmem [shape: f32[8,128], index: 0, kind: input, shape index: {}]
  %s1 = inlined_call_operand.hbm [shape: f32[128,128], index: 1, kind: input, shape index: {}]
  %s2 = inlined_call_operand.vmem [shape: f32[1,128], index: 2, kind: input, shape index: {}]
  %s3 = inlined_call_operand.hbm [shape: f32[8,128], index: 3, kind: output, shape index: {}]
  %s4 = sld [smem:[#allocation0]]
  $region34: #{pcalin_forward.1} parent=0
    _
  %s6 = ssub.s32 1, %s4
  %s7 = scalar_select 0, %s6, %s4
  $region1: #{pcalin_forward.1} parent=0
    #allocation2 [shape = 'u8[65536]{0}', space=vmem, size = 0x10000, scoped, tag = 'input window, operand 1, single buffered']
    #allocation3 [shape = 's32[1]{0}', space=sflag, size = 0x4, scoped, tag = 'scoped memory for pcalin_forward.1']
    #allocation4 [shape = 's32[1]{0}', space=sflag, size = 0x4, scoped, tag = 'scoped memory for pcalin_forward.1']
    #allocation5 [shape = 'u8[4096]{0}', space=vmem, size = 0x1000, scoped, tag = 'output window, operand 0, single buffered']
    %8 = vsyncpa [#allocation3], 0
    %9 = vsyncpa [#allocation4], 0
    // Predicated region
    $region2: #{pcalin_forward.1} parent=1 // pred_check
      _
    $region3: #{pcalin_forward.1} parent=1 // pred_check_branch
      %11 = sbr.rel (0) target = $region5
    $region4: #{pcalin_forward.1} parent=1 // pred_region
      _
    $region5: #{pcalin_forward.1} parent=1 // pred_fallthru
      _
    // Predicated region
    $region6: #{pcalin_forward.1} parent=1 // pred_check
      _
    $region7: #{pcalin_forward.1} parent=1 // pred_check_branch
      %13 = sbr.rel (0) target = $region9
    $region8: #{pcalin_forward.1} parent=1 // pred_region
      %s15 = ssub.s32 2048, 2048
      %16 = vsyncadd [#allocation3], %s15
      %s17 = sshll.u32 [#allocation2], 4
      %s18 = int_to_ptr.vmem [resolvable:$true] %s17
      %23 = dma.hbm_to_vmem [thread:$0]  %s1, 2048, %s18, [#allocation3], 128, 128, 8
    $region9: #{pcalin_forward.1} parent=1 // pred_fallthru
      _
    // Predicated region
    $region10: #{pcalin_forward.1} parent=1 // pred_check
      _
    $region11: #{pcalin_forward.1} parent=1 // pred_check_branch
      %25 = sbr.rel (0) target = $region13
    $region12: #{pcalin_forward.1} parent=1 // pred_region
      _
    $region13: #{pcalin_forward.1} parent=1 // pred_fallthru
      _
    // Predicated region
    $region14: #{pcalin_forward.1} parent=1 // pred_check
      _
    $region15: #{pcalin_forward.1} parent=1 // pred_check_branch
      %27 = sbr.rel (0) target = $region17
    $region16: #{pcalin_forward.1} parent=1 // pred_region
      %28 = dma.done [#allocation3], 2048
    $region17: #{pcalin_forward.1} parent=1 // pred_fallthru
      _
    %v29 = vld [vmem:[%s0] sm:$0xff]
    %v30 = vld [vmem:[#allocation2] sm:$0xff]
    %v31 = vld [vmem:[#allocation2 + $0x8] sm:$0xff]
    %v32 = vld [vmem:[#allocation2 + $0x10] sm:$0xff]
    %v33 = vld [vmem:[#allocation2 + $0x18] sm:$0xff]
    %v34 = vld [vmem:[#allocation2 + $0x20] sm:$0xff]
    %v35 = vld [vmem:[#allocation2 + $0x28] sm:$0xff]
    %v36 = vld [vmem:[#allocation2 + $0x30] sm:$0xff]
    %v37 = vld [vmem:[#allocation2 + $0x38] sm:$0xff]
    %v38 = vld [vmem:[#allocation2 + $0x40] sm:$0xff]
    %v39 = vld [vmem:[#allocation2 + $0x48] sm:$0xff]
    %v40 = vld [vmem:[#allocation2 + $0x50] sm:$0xff]
    %v41 = vld [vmem:[#allocation2 + $0x58] sm:$0xff]
    %v42 = vld [vmem:[#allocation2 + $0x60] sm:$0xff]
    %v43 = vld [vmem:[#allocation2 + $0x68] sm:$0xff]
    %v44 = vld [vmem:[#allocation2 + $0x70] sm:$0xff]
    %v45 = vld [vmem:[#allocation2 + $0x78] sm:$0xff]
    %46 = vmatprep.subr.mxu0 0.0
    %47 = vmatpush1.msra.mxu0 %v30
    %48 = vmatprep.subr.mxu0 0.0
    %49 = vmatpush1.msra.mxu0 %v31
    %50 = vmatprep.subr.mxu0 0.0
    %51 = vmatpush1.msra.mxu0 %v32
    %52 = vmatprep.subr.mxu0 0.0
    %53 = vmatpush1.msra.mxu0 %v33
    %54 = vmatprep.subr.mxu0 0.0
    %55 = vmatpush1.msra.mxu0 %v34
    %56 = vmatprep.subr.mxu0 0.0
    %57 = vmatpush1.msra.mxu0 %v35
    %58 = vmatprep.subr.mxu0 0.0
    %59 = vmatpush1.msra.mxu0 %v36
    %60 = vmatprep.subr.mxu0 0.0
    %61 = vmatpush1.msra.mxu0 %v37
    %62 = vmatprep.subr.mxu0 0.0
    %63 = vmatpush1.msra.mxu0 %v38
    %64 = vmatprep.subr.mxu0 0.0
    %65 = vmatpush1.msra.mxu0 %v39
    %66 = vmatprep.subr.mxu0 0.0
    %67 = vmatpush1.msra.mxu0 %v40
    %68 = vmatprep.subr.mxu0 0.0
    %69 = vmatpush1.msra.mxu0 %v41
    %70 = vmatprep.subr.mxu0 0.0
    %71 = vmatpush1.msra.mxu0 %v42
    %72 = vmatprep.subr.mxu0 0.0
    %73 = vmatpush1.msra.mxu0 %v43
    %74 = vmatprep.subr.mxu0 0.0
    %75 = vmatpush1.msra.mxu0 %v44
    %76 = vmatprep.subr.mxu0 0.0
    %77 = vmatpush1.msra.mxu0 %v45
    %78 = vmatprep.subr.mxu0 0.0
    %79 = vmatpush1.msra.mxu0 0.0
    %80 = vmatprep.subr.mxu0 0.0
    %81 = vmatpush1.msra.mxu0 0.0
    %82 = vmatprep.subr.mxu0 0.0
    %83 = vmatpush1.msra.mxu0 0.0
    %84 = vmatprep.subr.mxu0 0.0
    %85 = vmatpush1.msra.mxu0 0.0
    %86 = vmatprep.subr.mxu0 0.0
    %87 = vmatpush1.msra.mxu0 0.0
    %88 = vmatprep.subr.mxu0 0.0
    %89 = vmatpush1.msra.mxu0 0.0
    %90 = vmatprep.subr.mxu0 0.0
    %91 = vmatpush1.msra.mxu0 0.0
    %92 = vmatprep.subr.mxu0 0.0
    %93 = vmatpush1.msra.mxu0 0.0
    %94 = vmatprep.subr.mxu0 0.0
    %95 = vmatpush1.msra.mxu0 0.0
    %96 = vmatprep.subr.mxu0 0.0
    %97 = vmatpush1.msra.mxu0 0.0
    %98 = vmatprep.subr.mxu0 0.0
    %99 = vmatpush1.msra.mxu0 0.0
    %100 = vmatprep.subr.mxu0 0.0
    %101 = vmatpush1.msra.mxu0 0.0
    %102 = vmatprep.subr.mxu0 0.0
    %103 = vmatpush1.msra.mxu0 0.0
    %104 = vmatprep.subr.mxu0 0.0
    %105 = vmatpush1.msra.mxu0 0.0
    %106 = vmatprep.subr.mxu0 0.0
    %107 = vmatpush1.msra.mxu0 0.0
    %108 = vmatprep.subr.mxu0 0.0
    %109 = vmatpush1.msra.mxu0 0.0
    %110 = vmatprep.mubr.f32.mxu0 0.0
    %111 = vmatmul.mubr.f32.gmra.mrb[0].mxu0 %v29
    %v112 = vpop.f32.mrb[0].mxu0
    %v113 = vadd.f32 0.0, %v112
    %v114 = vpop.f32.mrb[0].mxu0
    %115 = vdwg.mxu0
    %p116 = scmp.eq.s32.totalorder 0, 0
    // Predicated region
    $region18: #{pcalin_forward.1} parent=1 // pred_check
      %p117 = pneg %p116
    $region19: #{pcalin_forward.1} parent=1 // pred_check_branch
      %119 = sbr.rel (%p117) target = $region21
    $region20: #{pcalin_forward.1} parent=1 // pred_region
      %v120 = vld [vmem:[%s2] sm:$0x1]
      %v122 = vlaneseq
      %v123 = vshrl.u32 %v122, 7
      %v124 = vsub.s32 0, %v123
      %v125 = vrot.slane %v120, %v124
      %v127 = vadd.f32 %v113, %v125
      %128 = vst [vmem:[#allocation5] sm:$0xff] %v127
    $region21: #{pcalin_forward.1} parent=1 // pred_fallthru
      _
    %p129 = scmp.ne.s32.totalorder 0, 0
    // Predicated region
    $region22: #{pcalin_forward.1} parent=1 // pred_check
      %p130 = pneg %p129
    $region23: #{pcalin_forward.1} parent=1 // pred_check_branch
      %132 = sbr.rel (%p130) target = $region25
    $region24: #{pcalin_forward.1} parent=1 // pred_region
      %v133 = vld [vmem:[#allocation5] sm:$0xff]
      %v134 = vadd.f32 %v133, %v113
      %135 = vst [vmem:[#allocation5] sm:$0xff] %v134
    $region25: #{pcalin_forward.1} parent=1 // pred_fallthru
      _
    // Predicated region
    $region26: #{pcalin_forward.1} parent=1 // pred_check
      _
    $region27: #{pcalin_forward.1} parent=1 // pred_check_branch
      %137 = sbr.rel (0) target = $region29
    $region28: #{pcalin_forward.1} parent=1 // pred_region
      %s139 = ssub.s32 128, 128
      %140 = vsyncadd [#allocation4], %s139
      %s142 = sshll.u32 [#allocation5], 4
      %s143 = int_to_ptr.vmem [resolvable:$true] %s142
      %145 = dma.vmem_to_hbm [thread:$0]  %s143, 128, %s3, [#allocation4]
    $region29: #{pcalin_forward.1} parent=1 // pred_fallthru
      _
    // Predicated region
    $region30: #{pcalin_forward.1} parent=1 // pred_check
      _
    $region31: #{pcalin_forward.1} parent=1 // pred_check_branch
      %147 = sbr.rel (0) target = $region33
    $region32: #{pcalin_forward.1} parent=1 // pred_region
      %148 = dma.done [#allocation4], 128
    $region33: #{pcalin_forward.1} parent=1 // pred_fallthru
      _
    %149 = vsyncpa [#allocation3], 1
    %150 = vsyncpa [#allocation4], 1

</llo_original>
